<compile_context>
chip_gen: v6e
topology: v6e:2x2x1
jax: 0.10.0
libtpu: 0.0.40
codegen_flags: <defaults>
</compile_context>

<pallas_src>
import jax
import jax.numpy as jnp
from jax.experimental import pallas as pl
from jax.experimental.pallas import tpu as pltpu


def _fused_kernel(p_ref, x_ref, o_ref):
    # p_ref: (Cout, Cin+1) f32 — columns [0:Cin] = conv_w * bn_scale, column [Cin] = shift
    # x_ref: (Cin, TM)          — lane-dense input tile (original dtype)
    # o_ref: (Cout, TM)         — lane-dense output tile
    p = p_ref[...]
    cin, tm = x_ref.shape

    # Chunk the lane axis so each chunk's live values stay comfortably in vregs.
    if tm % 512 == 0:
        ch = 512
    elif tm % 256 == 0:
        ch = 256
    else:
        ch = 128  # tm is always a multiple of 128

    use_vpu = cin <= 32
    if use_vpu:
        # Hoist per-input-channel weight columns and the shift column out of the
        # chunk loop (each is a (Cout, 1) slice, lane-broadcast once).
        w_cols = [p[:, ci:ci + 1] for ci in range(cin)]
    shift = p[:, cin:cin + 1]

    for c in range(tm // ch):
        lo, hi = c * ch, (c + 1) * ch
        xs = x_ref[:, lo:hi].astype(jnp.float32)                 # (Cin, ch)
        if use_vpu:
            # VPU broadcast-FMA: acc[co, :] = sum_ci w[co, ci] * x[ci, :]
            acc = w_cols[0] * xs[0:1, :]
            for ci in range(1, cin):
                acc = acc + w_cols[ci] * xs[ci:ci + 1, :]
        else:
            # Large contraction: let the MXU do it.
            acc = jnp.dot(p[:, :cin], xs, preferred_element_type=jnp.float32)
        acc = acc + shift                                         # folded bias / BN shift
        o_ref[:, lo:hi] = jnp.maximum(acc, 0.0).astype(o_ref.dtype)


def conv1x1_bn_relu_pallas(x_nchw, conv_w, conv_b, bn_gamma, bn_beta,
                           bn_mean, bn_var, eps=1e-5, block_m=8192):
    N, Cin, H, W = x_nchw.shape
    Cout = conv_w.shape[0]
    HW = H * W

    # --- fold conv bias + eval-mode BN; fold scale directly into the weights ---
    inv_std = 1.0 / jnp.sqrt(bn_var.astype(jnp.float32) + eps)
    scale = bn_gamma.astype(jnp.float32) * inv_std                               # (Cout,)
    w_fold = conv_w.reshape(Cout, Cin).astype(jnp.float32) * scale[:, None]      # (Cout, Cin)
    shift = (conv_b.astype(jnp.float32) - bn_mean.astype(jnp.float32)) * scale \
            + bn_beta.astype(jnp.float32)                                        # (Cout,)
    params = jnp.concatenate([w_fold, shift[:, None]], axis=1)                   # (Cout, Cin+1)

    # --- NCHW -> (N, Cin, M): pure reshape (free), M = H*W lands on the lane axis ---
    x3 = x_nchw.reshape(N, Cin, HW)

    # Lane-axis tiling: tm is a multiple of 128; pad M up to a multiple of tm.
    hw_pad = pl.cdiv(HW, 128) * 128
    tm = min(block_m, hw_pad)
    m_pad = pl.cdiv(HW, tm) * tm
    if m_pad != HW:
        x3 = jnp.pad(x3, ((0, 0), (0, 0), (0, m_pad - HW)))

    grid = (N, m_pad // tm)
    out3 = pl.pallas_call(
        _fused_kernel,
        out_shape=jax.ShapeDtypeStruct((N, Cout, m_pad), x_nchw.dtype),
        grid_spec=pltpu.PrefetchScalarGridSpec(
            num_scalar_prefetch=0,
            grid=grid,
            in_specs=[
                pl.BlockSpec((Cout, Cin + 1), lambda n, j: (0, 0)),     # resident params
                pl.BlockSpec((None, Cin, tm), lambda n, j: (n, 0, j)),  # lane-dense x tile
            ],
            out_specs=pl.BlockSpec((None, Cout, tm), lambda n, j: (n, 0, j)),
        ),
        compiler_params=pltpu.CompilerParams(
            dimension_semantics=("parallel", "parallel")),
    )(params, x3)

    # (N, Cout, M) is already NCHW-ordered: slice off padding and reshape (free).
    return out3[:, :, :HW].reshape(N, Cout, H, W)


def _reference(x_nchw, conv_w, conv_b, bn_gamma, bn_beta, bn_mean, bn_var, eps=1e-5):
    # plain-JAX reference of Conv2d(1x1) + eval-mode BN + ReLU
    z = jnp.einsum('nchw,oc->nohw', x_nchw.astype(jnp.float32),
                   conv_w.reshape(conv_w.shape[0], conv_w.shape[1]).astype(jnp.float32))
    z = z + conv_b[None, :, None, None]
    z = (z - bn_mean[None, :, None, None]) / jnp.sqrt(bn_var[None, :, None, None] + eps)
    z = z * bn_gamma[None, :, None, None] + bn_beta[None, :, None, None]
    return jnp.maximum(z, 0.0)


if __name__ == "__main__":
    key = jax.random.PRNGKey(0)
    N, Cin, H, W = 2, 4, 16, 16
    Cout = 8  # inter_planes

    k = jax.random.split(key, 7)
    x = jax.random.normal(k[0], (N, Cin, H, W), dtype=jnp.float32)
    conv_w = jax.random.normal(k[1], (Cout, Cin, 1, 1), dtype=jnp.float32) * 0.1
    conv_b = jax.random.normal(k[2], (Cout,), dtype=jnp.float32) * 0.1
    bn_gamma = jax.random.normal(k[3], (Cout,), dtype=jnp.float32) * 0.1 + 1.0
    bn_beta = jax.random.normal(k[4], (Cout,), dtype=jnp.float32) * 0.1
    bn_mean = jax.random.normal(k[5], (Cout,), dtype=jnp.float32) * 0.1
    bn_var = jax.nn.softplus(jax.random.normal(k[6], (Cout,), dtype=jnp.float32)) + 0.5

    out = conv1x1_bn_relu_pallas(x, conv_w, conv_b, bn_gamma, bn_beta, bn_mean, bn_var)
    out = jax.block_until_ready(out)

    ref = _reference(x, conv_w, conv_b, bn_gamma, bn_beta, bn_mean, bn_var)
    assert out.shape == (N, Cout, H, W)
    assert jnp.allclose(out, ref, atol=1e-4, rtol=1e-4), "mismatch vs reference"

    print("KERNEL_OK")
</pallas_src>

<mosaic_0001>
module attributes {stable_mosaic.version = 11 : i64} {
  func.func @_fused_kernel(%arg0: i32, %arg1: i32, %arg2: memref<8x5xf32, #tpu.memory_space<vmem>>, %arg3: memref<1x4x256xf32, #tpu.memory_space<vmem>>, %arg4: memref<1x8x256xf32, #tpu.memory_space<vmem>>) attributes {dimension_semantics = [#tpu.dimension_semantics<parallel>, #tpu.dimension_semantics<parallel>], iteration_bounds = array<i64: 2, 1>, scalar_prefetch = 0 : i64, scratch_operands = 0 : i64, tpu.core_type = #tpu.core_type<tc>, window_params = [{pipeline_mode = #tpu.pipeline_mode<synchronous>, transform_indices = @transform_0, window_bounds = array<i64: 8, 5>}, {transform_indices = @transform_1, window_bounds = array<i64: 1, 4, 256>}, {transform_indices = @transform_2, window_bounds = array<i64: 1, 8, 256>}]} {
    %c0 = arith.constant 0 : index
    %c0_0 = arith.constant 0 : index
    %0 = vector.load %arg2[%c0, %c0_0] : memref<8x5xf32, #tpu.memory_space<vmem>>, vector<8x5xf32>
    %1 = vector.extract_strided_slice %0 {offsets = [0, 0], sizes = [8, 1], strides = [1, 1]} : vector<8x5xf32> to vector<8x1xf32>
    %2 = vector.extract_strided_slice %0 {offsets = [0, 1], sizes = [8, 1], strides = [1, 1]} : vector<8x5xf32> to vector<8x1xf32>
    %3 = vector.extract_strided_slice %0 {offsets = [0, 2], sizes = [8, 1], strides = [1, 1]} : vector<8x5xf32> to vector<8x1xf32>
    %4 = vector.extract_strided_slice %0 {offsets = [0, 3], sizes = [8, 1], strides = [1, 1]} : vector<8x5xf32> to vector<8x1xf32>
    %5 = vector.extract_strided_slice %0 {offsets = [0, 4], sizes = [8, 1], strides = [1, 1]} : vector<8x5xf32> to vector<8x1xf32>
    %c0_1 = arith.constant 0 : index
    %c0_2 = arith.constant 0 : index
    %c0_3 = arith.constant 0 : index
    %6 = vector.load %arg3[%c0_1, %c0_2, %c0_3] : memref<1x4x256xf32, #tpu.memory_space<vmem>>, vector<1x4x256xf32>
    %7 = vector.shape_cast %6 : vector<1x4x256xf32> to vector<4x256xf32>
    %8 = vector.extract_strided_slice %7 {offsets = [0, 0], sizes = [1, 256], strides = [1, 1]} : vector<4x256xf32> to vector<1x256xf32>
    %9 = vector.broadcast %1 : vector<8x1xf32> to vector<8x256xf32>
    %10 = vector.broadcast %8 : vector<1x256xf32> to vector<8x256xf32>
    %11 = arith.mulf %9, %10 : vector<8x256xf32>
    %12 = vector.extract_strided_slice %7 {offsets = [1, 0], sizes = [1, 256], strides = [1, 1]} : vector<4x256xf32> to vector<1x256xf32>
    %13 = vector.broadcast %2 : vector<8x1xf32> to vector<8x256xf32>
    %14 = vector.broadcast %12 : vector<1x256xf32> to vector<8x256xf32>
    %15 = arith.mulf %13, %14 : vector<8x256xf32>
    %16 = arith.addf %11, %15 : vector<8x256xf32>
    %17 = vector.extract_strided_slice %7 {offsets = [2, 0], sizes = [1, 256], strides = [1, 1]} : vector<4x256xf32> to vector<1x256xf32>
    %18 = vector.broadcast %3 : vector<8x1xf32> to vector<8x256xf32>
    %19 = vector.broadcast %17 : vector<1x256xf32> to vector<8x256xf32>
    %20 = arith.mulf %18, %19 : vector<8x256xf32>
    %21 = arith.addf %16, %20 : vector<8x256xf32>
    %22 = vector.extract_strided_slice %7 {offsets = [3, 0], sizes = [1, 256], strides = [1, 1]} : vector<4x256xf32> to vector<1x256xf32>
    %23 = vector.broadcast %4 : vector<8x1xf32> to vector<8x256xf32>
    %24 = vector.broadcast %22 : vector<1x256xf32> to vector<8x256xf32>
    %25 = arith.mulf %23, %24 : vector<8x256xf32>
    %26 = arith.addf %21, %25 : vector<8x256xf32>
    %27 = vector.broadcast %5 : vector<8x1xf32> to vector<8x256xf32>
    %28 = arith.addf %26, %27 : vector<8x256xf32>
    %cst = arith.constant 0.000000e+00 : f32
    %29 = vector.broadcast %cst : f32 to vector<8x256xf32>
    %30 = arith.maximumf %28, %29 : vector<8x256xf32>
    %c0_4 = arith.constant 0 : index
    %c0_5 = arith.constant 0 : index
    %c0_6 = arith.constant 0 : index
    %31 = vector.load %arg4[%c0_4, %c0_5, %c0_6] : memref<1x8x256xf32, #tpu.memory_space<vmem>>, vector<1x8x256xf32>
    %32 = vector.shape_cast %31 : vector<1x8x256xf32> to vector<8x256xf32>
    %33 = vector.shape_cast %30 : vector<8x256xf32> to vector<1x8x256xf32>
    tpu.vector_store %arg4[%c0_4, %c0_5, %c0_6], %33 {strides = array<i32>} : memref<1x8x256xf32, #tpu.memory_space<vmem>>, vector<1x8x256xf32>,
    return
  }
  func.func @transform_0(%arg0: i32, %arg1: i32) -> (i32, i32) {
    %c0_i32 = arith.constant 0 : i32
    %c0_i32_0 = arith.constant 0 : i32
    %c0_i32_1 = arith.constant 0 : i32
    return %c0_i32, %c0_i32_0 : i32, i32
  }
  func.func @transform_1(%arg0: i32, %arg1: i32) -> (i32, i32, i32) {
    %c0_i32 = arith.constant 0 : i32
    %c0_i32_0 = arith.constant 0 : i32
    return %arg0, %c0_i32, %arg1 : i32, i32, i32
  }
  func.func @transform_2(%arg0: i32, %arg1: i32) -> (i32, i32, i32) {
    %c0_i32 = arith.constant 0 : i32
    %c0_i32_0 = arith.constant 0 : i32
    return %arg0, %c0_i32, %arg1 : i32, i32, i32
  }
}

</mosaic_0001>

<llo_original>
// kernel: tpu_custom_call.1
$region0: #{tpu_custom_call.1}
  #allocation0 [shape = 'u32[]', space=smem, size = 0x4, offset = 0x4, fixed_abs, tag = 'smem constant byte address 0x4 - core index']
  #allocation1 [shape = 'u32[144,128]{1,0:T(1,128)}', space=vmem, size = 0x12000, scoped, tag = 'internal scratch']
  %s0 = inlined_call_operand.hbm [shape: f32[8,5], index: 0, kind: input, shape index: {}]
  %s1 = inlined_call_operand.hbm [shape: f32[2,4,256], index: 1, kind: input, shape index: {}]
  %s2 = inlined_call_operand.hbm [shape: f32[2,8,256], index: 2, kind: output, shape index: {}]
  %s3 = sld [smem:[#allocation0]]
  $region49: #{tpu_custom_call.1} parent=0
    _
  %s5 = ssub.s32 1, %s3
  %s6 = scalar_select 0, %s5, %s3
  $region1: #{tpu_custom_call.1} parent=0
    #allocation2 [shape = 'u8[4096]{0}', space=vmem, size = 0x1000, scoped, tag = 'input window, operand 0, single buffered']
    #allocation3 [shape = 's32[2]{0}', space=sflag, size = 0x8, scoped, tag = 'scoped memory for tpu_custom_call.1']
    #allocation4 [shape = 's32[2]{0}', space=sflag, size = 0x8, scoped, tag = 'scoped memory for tpu_custom_call.1']
    #allocation5 [shape = 'u8[8192]{0}', space=vmem, size = 0x2000, scoped, tag = 'input window, operand 1']
    #allocation6 [shape = 's32[2]{0}', space=sflag, size = 0x8, scoped, tag = 'scoped memory for tpu_custom_call.1']
    #allocation7 [shape = 'u8[16384]{0}', space=vmem, size = 0x4000, scoped, tag = 'output window, operand 0']
    %7 = vsyncpa [#allocation3], 0
    %8 = vsyncpa [#allocation6], 0
    %s9 = scalar_lea.sflag [#allocation6], 1
    %10 = vsyncpa %s9, 0
    %11 = vsyncpa [#allocation4], 0
    %s12 = scalar_lea.sflag [#allocation4], 1
    %13 = vsyncpa %s12, 0
    loop: start=0, step=1, limit=4
    $region2: #{tpu_custom_call.1} parent=1 // loop_pre_header
      _
    $region3: #{tpu_custom_call.1} parent=1 // loop_header
      %s15 = sphi 0, %s19
      %p16 = scmp.ge.s32.totalorder %s15, 4
      %s22 = sphi 0, %s34
      %s23 = sphi 0, %s30
      %s24 = sphi 0, %s22
      %s25 = sphi 0, %s23
      %s26 = sphi 0, %s24
      %s27 = sphi 0, %s25
      %s35 = sphi 0, %s35
      %s37 = sphi 0, %s35
      %s38 = sphi 0, %s37
      %s52 = sphi 0, %s38
      %s60 = sphi 0, %s62
      %s63 = sphi 0, %s60
      %s64 = sphi 0, %s63
      %s80 = sphi 0, %s64
      %s88 = sphi 0, %s90
      %s91 = sphi 0, %s88
      %s92 = sphi 0, %s91
      %s108 = sphi 0, %s92
    $region4: #{tpu_custom_call.1} parent=1 // loop_header_branch
      %18 = sbr.rel (%p16) target = $region8
    $region5: #{tpu_custom_call.1} parent=1 // loop_body
      %s20 = ssub.s32 %s15, 1
      %s21 = ssub.s32 %s15, 2
      %s28 = sadd.s32 1, %s23
      %p29 = scmp.ge.s32.totalorder %s28, 1
      %s30 = scalar_select %p29, 0, %s28
      %s31 = sadd.s32 1, %s22
      %s32 = scalar_select %p29, %s31, %s22
      %p33 = scmp.ge.s32.totalorder %s32, 2
      %s34 = scalar_select %p33, 0, %s32
      %s36 = sadd.s32 %s35, 1
      %p39 = scmp.eq.s32.totalorder %s15, 1
      %p40 = scmp.ne.s32.totalorder %s35, %s37
      %p41 = scmp.eq.s32.totalorder %s15, 0
      %p42 = por %p40, %p41
      %p43 = scmp.ne.s32.totalorder %s35, %s37
      %p44 = scmp.eq.s32.totalorder %s20, 1
      %p45 = por %p43, %p44
      %p46 = scmp.ne.s32.totalorder %s37, %s38
      %p47 = scmp.eq.s32.totalorder %s20, 0
      %p48 = por %p46, %p47
      %p49 = scmp.ne.s32.totalorder %s37, %s38
      %p50 = scmp.eq.s32.totalorder %s21, 1
      %p51 = por %p49, %p50
      %p53 = scmp.ne.s32.totalorder %s38, %s52
      %p54 = scmp.eq.s32.totalorder %s21, 0
      %p55 = por %p53, %p54
      %s56 = ssub.s32 %s22, %s34
      %s57 = ssub.s32 %s23, %s30
      %s58 = sor.u32 %s56, %s57
      %p59 = scmp.eq.s32.totalorder %s58, 0
      %s61 = sadd.s32 %s60, 1
      %s62 = scalar_select %p59, %s60, %s61
      %p65 = pneg %p59
      %p66 = scmp.eq.s32.totalorder %s15, 1
      %p67 = por %p65, %p66
      %p68 = scmp.ne.s32.totalorder %s60, %s63
      %p69 = scmp.eq.s32.totalorder %s15, 0
      %p70 = por %p68, %p69
      %p71 = scmp.ne.s32.totalorder %s60, %s63
      %p72 = scmp.eq.s32.totalorder %s20, 1
      %p73 = por %p71, %p72
      %p74 = scmp.ne.s32.totalorder %s63, %s64
      %p75 = scmp.eq.s32.totalorder %s20, 0
      %p76 = por %p74, %p75
      %p77 = scmp.ne.s32.totalorder %s63, %s64
      %p78 = scmp.eq.s32.totalorder %s21, 1
      %p79 = por %p77, %p78
      %p81 = scmp.ne.s32.totalorder %s64, %s80
      %p82 = scmp.eq.s32.totalorder %s21, 0
      %p83 = por %p81, %p82
      %s84 = ssub.s32 %s22, %s34
      %s85 = ssub.s32 %s23, %s30
      %s86 = sor.u32 %s84, %s85
      %p87 = scmp.eq.s32.totalorder %s86, 0
      %s89 = sadd.s32 %s88, 1
      %s90 = scalar_select %p87, %s88, %s89
      %p93 = pneg %p87
      %p94 = scmp.eq.s32.totalorder %s15, 1
      %p95 = por %p93, %p94
      %p96 = scmp.ne.s32.totalorder %s88, %s91
      %p97 = scmp.eq.s32.totalorder %s15, 0
      %p98 = por %p96, %p97
      %p99 = scmp.ne.s32.totalorder %s88, %s91
      %p100 = scmp.eq.s32.totalorder %s20, 1
      %p101 = por %p99, %p100
      %p102 = scmp.ne.s32.totalorder %s91, %s92
      %p103 = scmp.eq.s32.totalorder %s20, 0
      %p104 = por %p102, %p103
      %p105 = scmp.ne.s32.totalorder %s91, %s92
      %p106 = scmp.eq.s32.totalorder %s21, 1
      %p107 = por %p105, %p106
      %p109 = scmp.ne.s32.totalorder %s92, %s108
      %p110 = scmp.eq.s32.totalorder %s21, 0
      %p111 = por %p109, %p110
      %p112 = scmp.le.s32.totalorder 1, %s15
      %p113 = scmp.lt.s32.totalorder %s15, 3
      %p114 = pnand %p112, %p113
      %p115 = pneg %p114
      // Predicated region
      $region9: #{tpu_custom_call.1} parent=5 // pred_check
        _
      $region10: #{tpu_custom_call.1} parent=5 // pred_check_branch
        %117 = sbr.rel (%p114) target = $region12
      $region11: #{tpu_custom_call.1} parent=5 // pred_region
        %s118 = ssub.s32 %s15, 1
        // Predicated region
        $region13: #{tpu_custom_call.1} parent=11 // pred_check
          %p119 = pneg %p48
        $region14: #{tpu_custom_call.1} parent=11 // pred_check_branch
          %121 = sbr.rel (%p119) target = $region16
        $region15: #{tpu_custom_call.1} parent=11 // pred_region
          %s123 = ssub.s32 128, 128
          %124 = vsyncadd [#allocation3], %s123
          %s126 = sshll.u32 [#allocation2], 4
          %s127 = int_to_ptr.vmem [resolvable:$true] %s126
          %129 = dma.hbm_to_vmem [thread:$0]  %s0, 128, %s127, [#allocation3]
        $region16: #{tpu_custom_call.1} parent=11 // pred_fallthru
          _
      $region12: #{tpu_custom_call.1} parent=5 // pred_fallthru
        _
      %p130 = scmp.lt.s32.totalorder %s15, 2
      // Predicated region
      $region17: #{tpu_custom_call.1} parent=5 // pred_check
        %p131 = pneg %p130
      $region18: #{tpu_custom_call.1} parent=5 // pred_check_branch
        %133 = sbr.rel (%p131) target = $region20
      $region19: #{tpu_custom_call.1} parent=5 // pred_region
        // Predicated region
        $region21: #{tpu_custom_call.1} parent=19 // pred_check
          %p134 = pneg %p70
        $region22: #{tpu_custom_call.1} parent=19 // pred_check_branch
          %136 = sbr.rel (%p134) target = $region24
        $region23: #{tpu_custom_call.1} parent=19 // pred_region
          %s137 = sand.u32 %s60, 1
          %s138 = scalar_lea.sflag [#allocation6], %s137
          %s139 = sand.u32 %s60, 1
          %s140 = smul.addr %s139, 8
          %s141 = scalar_lea.vmem [#allocation5], %s140
          %s142 = smul.u32 2, %s23
          %s144 = ssub.s32 128, 128
          %145 = vsyncadd %s138, %s144
          %s146 = smul.addr %s22, 2
          %s147 = sadd.s32 %s142, %s146
          %s148 = smul.addr %s147, 64
          %s149 = scalar_lea.hbm %s1, %s148
          %s151 = sshll.u32 %s141, 4
          %s152 = int_to_ptr.vmem [resolvable:$true] %s151
          %154 = dma.hbm_to_vmem [thread:$0]  %s149, 128, %s152, %s138
        $region24: #{tpu_custom_call.1} parent=19 // pred_fallthru
          _
      $region20: #{tpu_custom_call.1} parent=5 // pred_fallthru
        _
      %p155 = scmp.le.s32.totalorder 1, %s15
      %p156 = scmp.lt.s32.totalorder %s15, 3
      %p157 = pnand %p155, %p156
      %p158 = pneg %p157
      // Predicated region
      $region25: #{tpu_custom_call.1} parent=5 // pred_check
        _
      $region26: #{tpu_custom_call.1} parent=5 // pred_check_branch
        %160 = sbr.rel (%p157) target = $region28
      $region27: #{tpu_custom_call.1} parent=5 // pred_region
        %s161 = ssub.s32 %s15, 1
        // Predicated region
        $region29: #{tpu_custom_call.1} parent=27 // pred_check
          %p162 = pneg %p48
        $region30: #{tpu_custom_call.1} parent=27 // pred_check_branch
          %164 = sbr.rel (%p162) target = $region32
        $region31: #{tpu_custom_call.1} parent=27 // pred_region
          %165 = dma.done [#allocation3], 128
        $region32: #{tpu_custom_call.1} parent=27 // pred_fallthru
          _
        %s166 = sand.u32 %s63, 1
        %s167 = scalar_lea.sflag [#allocation6], %s166
        %s168 = sand.u32 %s63, 1
        %s169 = smul.addr %s168, 8
        %s170 = scalar_lea.vmem [#allocation5], %s169
        // Predicated region
        $region33: #{tpu_custom_call.1} parent=27 // pred_check
          %p171 = pneg %p76
        $region34: #{tpu_custom_call.1} parent=27 // pred_check_branch
          %173 = sbr.rel (%p171) target = $region36
        $region35: #{tpu_custom_call.1} parent=27 // pred_region
          %174 = dma.done %s167, 128
        $region36: #{tpu_custom_call.1} parent=27 // pred_fallthru
          _
        %p175 = pneg %p48
        %p176 = pneg %p45
        %s177 = sand.u32 %s63, 1
        %s178 = scalar_lea.sflag [#allocation6], %s177
        %s179 = sand.u32 %s63, 1
        %s180 = smul.addr %s179, 8
        %s181 = scalar_lea.vmem [#allocation5], %s180
        %p182 = pneg %p76
        %p183 = pneg %p73
        %p184 = pneg %p104
        %p185 = pneg %p101
        %s186 = sand.u32 %s91, 1
        %s187 = scalar_lea.sflag [#allocation4], %s186
        %s188 = sand.u32 %s91, 1
        %s189 = smul.addr %s188, 16
        %s190 = scalar_lea.vmem [#allocation7], %s189
        %s191 = smul.u32 2, %s25
        %s192 = smul.u32 2, %s25
        %v193 = vld [vmem:[#allocation2] sm:$0xff]
        %v194 = vld [vmem:[%s170] sm:$0xff]
        %196 = vset.pattern.permute.xlu0 0
        %197 = vperm.xlu0 %196, %v193
        %v198 = vpop.permute.xlu0 %197
        %v201 = vlaneseq
        %v202 = vshrl.u32 %v201, 7
        %v203 = vsub.s32 0, %v202
        %v204 = vrot.slane %v194, %v203
        %v205 = vlaneseq
        %v206 = vshrl.u32 %v205, 7
        %v207 = vsub.s32 4, %v206
        %v208 = vrot.slane %v194, %v207
        %v211 = vlaneseq
        %v212 = vshrl.u32 %v211, 7
        %v213 = vsub.s32 0, %v212
        %v214 = vrot.slane %v204, %v213
        %v215 = vlaneseq
        %v216 = vshrl.u32 %v215, 7
        %v217 = vsub.s32 0, %v216
        %v218 = vrot.slane %v208, %v217
        %v219 = vmul.f32 %v198, %v214
        %v220 = vmul.f32 %v198, %v218
        %221 = vset.pattern.permute.xlu0 1
        %222 = vperm.xlu0 %221, %v193
        %v223 = vpop.permute.xlu0 %222
        %v225 = vlaneseq
        %v226 = vshrl.u32 %v225, 7
        %v227 = vsub.s32 1, %v226
        %v228 = vrot.slane %v194, %v227
        %v229 = vlaneseq
        %v230 = vshrl.u32 %v229, 7
        %v231 = vsub.s32 5, %v230
        %v232 = vrot.slane %v194, %v231
        %v235 = vlaneseq
        %v236 = vshrl.u32 %v235, 7
        %v237 = vsub.s32 1, %v236
        %v238 = vrot.slane %v228, %v237
        %v239 = vlaneseq
        %v240 = vshrl.u32 %v239, 7
        %v241 = vsub.s32 1, %v240
        %v242 = vrot.slane %v232, %v241
        %v243 = vmul.f32 %v223, %v238
        %v244 = vmul.f32 %v223, %v242
        %v245 = vadd.f32 %v219, %v243
        %v246 = vadd.f32 %v220, %v244
        %247 = vset.pattern.permute.xlu0 2
        %248 = vperm.xlu0 %247, %v193
        %v249 = vpop.permute.xlu0 %248
        %v251 = vlaneseq
        %v252 = vshrl.u32 %v251, 7
        %v253 = vsub.s32 2, %v252
        %v254 = vrot.slane %v194, %v253
        %v255 = vlaneseq
        %v256 = vshrl.u32 %v255, 7
        %v257 = vsub.s32 6, %v256
        %v258 = vrot.slane %v194, %v257
        %v261 = vlaneseq
        %v262 = vshrl.u32 %v261, 7
        %v263 = vsub.s32 2, %v262
        %v264 = vrot.slane %v254, %v263
        %v265 = vlaneseq
        %v266 = vshrl.u32 %v265, 7
        %v267 = vsub.s32 2, %v266
        %v268 = vrot.slane %v258, %v267
        %v269 = vmul.f32 %v249, %v264
        %v270 = vmul.f32 %v249, %v268
        %v271 = vadd.f32 %v245, %v269
        %v272 = vadd.f32 %v246, %v270
        %273 = vset.pattern.permute.xlu0 3
        %274 = vperm.xlu0 %273, %v193
        %v275 = vpop.permute.xlu0 %274
        %v277 = vlaneseq
        %v278 = vshrl.u32 %v277, 7
        %v279 = vsub.s32 3, %v278
        %v280 = vrot.slane %v194, %v279
        %v281 = vlaneseq
        %v282 = vshrl.u32 %v281, 7
        %v283 = vsub.s32 7, %v282
        %v284 = vrot.slane %v194, %v283
        %v287 = vlaneseq
        %v288 = vshrl.u32 %v287, 7
        %v289 = vsub.s32 3, %v288
        %v290 = vrot.slane %v280, %v289
        %v291 = vlaneseq
        %v292 = vshrl.u32 %v291, 7
        %v293 = vsub.s32 3, %v292
        %v294 = vrot.slane %v284, %v293
        %v295 = vmul.f32 %v275, %v290
        %v296 = vmul.f32 %v275, %v294
        %v297 = vadd.f32 %v271, %v295
        %v298 = vadd.f32 %v272, %v296
        %299 = vset.pattern.permute.xlu0 4
        %300 = vperm.xlu0 %299, %v193
        %v301 = vpop.permute.xlu0 %300
        %v303 = vadd.f32 %v297, %v301
        %v304 = vadd.f32 %v298, %v301
        %v305 = vmax.f32 %v303, 0.0
        %v306 = vmax.f32 %v304, 0.0
        %307 = vst [vmem:[%s190] sm:$0xff] %v305
        %308 = vst [vmem:[%s190 + $0x8] sm:$0xff] %v306
        %s309 = sand.u32 %s91, 1
        %s310 = scalar_lea.sflag [#allocation4], %s309
        %s311 = sand.u32 %s91, 1
        %s312 = smul.addr %s311, 16
        %s313 = scalar_lea.vmem [#allocation7], %s312
        // Predicated region
        $region37: #{tpu_custom_call.1} parent=27 // pred_check
          %p314 = pneg %p101
        $region38: #{tpu_custom_call.1} parent=27 // pred_check_branch
          %316 = sbr.rel (%p314) target = $region40
        $region39: #{tpu_custom_call.1} parent=27 // pred_region
          %s317 = smul.u32 2, %s25
          %s319 = ssub.s32 256, 256
          %320 = vsyncadd %s310, %s319
          %s321 = smul.addr %s24, 2
          %s322 = sadd.s32 %s317, %s321
          %s323 = smul.addr %s322, 128
          %s324 = scalar_lea.hbm %s2, %s323
          %s326 = sshll.u32 %s313, 4
          %s327 = int_to_ptr.vmem [resolvable:$true] %s326
          %329 = dma.vmem_to_hbm [thread:$0]  %s327, 256, %s324, %s310
        $region40: #{tpu_custom_call.1} parent=27 // pred_fallthru
          _
      $region28: #{tpu_custom_call.1} parent=5 // pred_fallthru
        _
      %p330 = scmp.le.s32.totalorder 2, %s15
      // Predicated region
      $region41: #{tpu_custom_call.1} parent=5 // pred_check
        %p331 = pneg %p330
      $region42: #{tpu_custom_call.1} parent=5 // pred_check_branch
        %333 = sbr.rel (%p331) target = $region44
      $region43: #{tpu_custom_call.1} parent=5 // pred_region
        %s334 = ssub.s32 %s15, 2
        // Predicated region
        $region45: #{tpu_custom_call.1} parent=43 // pred_check
          %p335 = pneg %p107
        $region46: #{tpu_custom_call.1} parent=43 // pred_check_branch
          %337 = sbr.rel (%p335) target = $region48
        $region47: #{tpu_custom_call.1} parent=43 // pred_region
          %s338 = sand.u32 %s92, 1
          %s339 = scalar_lea.sflag [#allocation4], %s338
          %s340 = sand.u32 %s92, 1
          %s341 = smul.addr %s340, 16
          %s342 = scalar_lea.vmem [#allocation7], %s341
          %343 = dma.done %s339, 256
        $region48: #{tpu_custom_call.1} parent=43 // pred_fallthru
          _
      $region44: #{tpu_custom_call.1} parent=5 // pred_fallthru
        _
    $region6: #{tpu_custom_call.1} parent=1 // loop_footer
      %s19 = sadd.s32 1, %s15
    $region7: #{tpu_custom_call.1} parent=1 // loop_footer_branch
      %14 = sbr.rel target = $region3
    $region8: #{tpu_custom_call.1} parent=1 // loop_exit
      _
    %344 = vsyncpa [#allocation3], 1
    %s345 = scalar_lea.sflag [#allocation3], 1
    %346 = vsyncpa %s345, 1
    %347 = vsyncpa [#allocation6], 1
    %s348 = scalar_lea.sflag [#allocation6], 1
    %349 = vsyncpa %s348, 1
    %350 = vsyncpa [#allocation4], 1
    %s351 = scalar_lea.sflag [#allocation4], 1
    %352 = vsyncpa %s351, 1

</llo_original>
